<compile_context>
chip_gen: v7x
topology: tpu7x:2x2x1
jax: 0.10.0
libtpu: 0.0.40
codegen_flags: <defaults>
</compile_context>

<pallas_src>
import math
import functools

import jax
import jax.numpy as jnp
from jax.experimental import pallas as pl
from jax.experimental.pallas import tpu as pltpu

_VMEM_LIMIT = 32 * 1024 * 1024  # safe on v5e/v6e/v7x (v7x has 64 MiB total)


# ----------------------------- tiling helpers -----------------------------

def _row_tile(m, target=256):
    """Largest multiple-of-8 divisor of m that is <= target and < m (so the M
    axis exposes >=2 parallel grid steps for megacore); falls back to m."""
    for t in range(min(target, m), 7, -1):
        if m % t == 0 and t % 8 == 0 and t < m:
            return t
    return m


def _k_tile(k, target=512):
    """Largest multiple-of-128 divisor of k that is <= target; else full k."""
    for t in range(min(target, k), 127, -1):
        if k % t == 0 and t % 128 == 0:
            return t
    return k


def _seq_tile(l, target=64):
    """Sequence tile for the attention grid (multiple of 8 or full length)."""
    for t in range(min(target, l), 7, -1):
        if l % t == 0 and t % 8 == 0:
            return t
    return l


def _layernorm(y, gamma, beta, eps=1e-5):
    mean = jnp.mean(y, axis=-1, keepdims=True)
    var = jnp.mean(jnp.square(y - mean), axis=-1, keepdims=True)
    return (y - mean) * jax.lax.rsqrt(var + eps) * gamma + beta


# ----------------------- tiled fused linear (+ epilogue) -------------------

def _fused_linear_kernel(x_ref, w_ref, b_ref, *refs, activation, postprocess):
    if postprocess:
        g_ref, bt_ref, o_ref, acc_ref = refs
    else:
        o_ref, acc_ref = refs

    @pl.when(pl.program_id(1) == 0)
    def _():
        acc_ref[...] = jnp.zeros_like(acc_ref)

    acc_ref[...] += jnp.dot(x_ref[...], w_ref[...],
                            preferred_element_type=jnp.float32)

    @pl.when(pl.program_id(1) == pl.num_programs(1) - 1)
    def _():
        y = acc_ref[...] + b_ref[...]
        if activation == "relu":
            y = jnp.maximum(y, 0.0)
        if postprocess:  # Layer_Process('an'): out = out + out, then LayerNorm
            y = y + y
            y = _layernorm(y, g_ref[...], bt_ref[...])
        o_ref[...] = y.astype(o_ref.dtype)


def fused_linear(x, w, b, *, activation=None, post_ln=None,
                 tm_target=256, tk_target=512):
    """y = act(x @ w + b), optionally followed by the fused 'an' post-process.

    Tiled over (M, K): grid (M//tm, K//tk), VMEM f32 accumulator, epilogue at
    the last K step.  N is kept whole (every N here fits VMEM and the
    LayerNorm epilogue needs full rows)."""
    M, K = x.shape
    N = w.shape[1]
    tm = _row_tile(M, tm_target)
    tk = _k_tile(K, tk_target)
    postprocess = post_ln is not None

    in_specs = [
        pl.BlockSpec((tm, tk), lambda m, k: (m, k)),
        pl.BlockSpec((tk, N), lambda m, k: (k, 0)),
        pl.BlockSpec((1, N), lambda m, k: (0, 0)),
    ]
    args = [x, w, b.reshape(1, N)]
    if postprocess:
        gamma, beta = post_ln
        in_specs += [pl.BlockSpec((1, N), lambda m, k: (0, 0)),
                     pl.BlockSpec((1, N), lambda m, k: (0, 0))]
        args += [gamma.reshape(1, N), beta.reshape(1, N)]

    return pl.pallas_call(
        functools.partial(_fused_linear_kernel, activation=activation,
                          postprocess=postprocess),
        grid=(M // tm, K // tk),
        in_specs=in_specs,
        out_specs=pl.BlockSpec((tm, N), lambda m, k: (m, 0)),
        out_shape=jax.ShapeDtypeStruct((M, N), x.dtype),
        scratch_shapes=[pltpu.VMEM((tm, N), jnp.float32)],
        compiler_params=pltpu.CompilerParams(
            dimension_semantics=("parallel", "arbitrary"),
            vmem_limit_bytes=_VMEM_LIMIT),
    )(*args)


# ----------------------- fused FFN + 'an' post-process ---------------------

def _ffn_kernel(x_ref, w0_ref, b0_ref, w1_ref, b1_ref, g_ref, bt_ref, o_ref):
    h = jnp.dot(x_ref[...], w0_ref[...], preferred_element_type=jnp.float32)
    h = jnp.maximum(h + b0_ref[...], 0.0)            # w0 + ReLU (stays on-chip)
    y = jnp.dot(h, w1_ref[...], preferred_element_type=jnp.float32)
    y = y + b1_ref[...]
    y = y + y                                        # Layer_Process('a')
    y = _layernorm(y, g_ref[...], bt_ref[...])       # Layer_Process('n')
    o_ref[...] = y.astype(o_ref.dtype)


def ffn_post(x, w0, b0, w1, b1, gamma, beta, *, tm_target=256):
    """PositionWise_FeedForward([H, F, H], relu) fused with the 'an'
    post-process: the (tm, F) intermediate never round-trips HBM.
    # TODO(synk): K-tile the two weights with a VMEM accumulator for very
    # large H*F (not needed at these sizes)."""
    M, H = x.shape
    F = w0.shape[1]
    tm = _row_tile(M, tm_target)
    return pl.pallas_call(
        _ffn_kernel,
        grid=(M // tm,),
        in_specs=[
            pl.BlockSpec((tm, H), lambda m: (m, 0)),
            pl.BlockSpec((H, F), lambda m: (0, 0)),
            pl.BlockSpec((1, F), lambda m: (0, 0)),
            pl.BlockSpec((F, H), lambda m: (0, 0)),
            pl.BlockSpec((1, H), lambda m: (0, 0)),
            pl.BlockSpec((1, H), lambda m: (0, 0)),
            pl.BlockSpec((1, H), lambda m: (0, 0)),
        ],
        out_specs=pl.BlockSpec((tm, H), lambda m: (m, 0)),
        out_shape=jax.ShapeDtypeStruct((M, H), x.dtype),
        compiler_params=pltpu.CompilerParams(
            dimension_semantics=("parallel",),
            vmem_limit_bytes=_VMEM_LIMIT),
    )(x, w0, b0.reshape(1, F), w1, b1.reshape(1, H),
      gamma.reshape(1, H), beta.reshape(1, H))


# ---------------- four-position fusion (algebraically folded) --------------

def _table_proj_kernel(t_ref, w_ref, o_ref):
    o_ref[...] = jnp.dot(t_ref[...], w_ref[...],
                         preferred_element_type=jnp.float32).astype(o_ref.dtype)


def project_pe_tables(pe_stack, w_fus):
    """Pre-project the four (T, H) PE tables through the matching (H, H)
    slices of the 4H->H fusion weight.  Gather commutes with the per-table
    matmul, so this removes the B*L*L x 4H fusion matmul entirely."""
    n, T, H = pe_stack.shape
    return pl.pallas_call(
        _table_proj_kernel,
        grid=(n,),
        in_specs=[
            pl.BlockSpec((None, T, H), lambda s: (s, 0, 0)),
            pl.BlockSpec((None, H, H), lambda s: (s, 0, 0)),
        ],
        out_specs=pl.BlockSpec((None, T, H), lambda s: (s, 0, 0)),
        out_shape=jax.ShapeDtypeStruct((n, T, H), pe_stack.dtype),
        compiler_params=pltpu.CompilerParams(
            dimension_semantics=("parallel",)),
    )(pe_stack, w_fus)


def build_rel_pos_embedding(proj_tables, b_fus, pos_s, pos_e, max_seq_len):
    """Four_Pos_Fusion_Embedding('ff') with the fusion matmul folded into the
    pre-projected tables:  rel = ReLU(sum_i proj_i[idx_i] + b)."""
    B, L = pos_s.shape
    H = proj_tables.shape[-1]

    def _diff(a, c):
        return (a[:, :, None] - c[:, None, :] + max_seq_len).reshape(-1)

    indices = (_diff(pos_s, pos_s), _diff(pos_s, pos_e),
               _diff(pos_e, pos_s), _diff(pos_e, pos_e))
    # TODO(synk): the data-dependent row gather is left to XLA (jnp.take); a
    # Pallas gather would need manual per-index DMA and is not worth it here.
    acc = b_fus[None, :]
    for i in range(4):
        acc = acc + jnp.take(proj_tables[i], indices[i], axis=0)
    rel = jnp.maximum(acc, 0.0)
    return rel.reshape(B, L, L, H)


# ------------------- flash-style lattice relative attention ----------------

def _lattice_attn_kernel(q_ref, k_ref, v_ref, rel_ref, wr_ref, br_ref, u_ref,
                         vp_ref, mask_ref, o_ref, m_scr, l_scr, acc_scr, *,
                         num_heads, head_dim, scale, tq, tk, bd_on_mxu):
    ki = pl.program_id(2)

    @pl.when(ki == 0)
    def _():
        m_scr[...] = jnp.full_like(m_scr, -jnp.inf)
        l_scr[...] = jnp.zeros_like(l_scr)
        acc_scr[...] = jnp.zeros_like(acc_scr)

    # Per-layer w_r projection fused into the kernel: the projected rel tile is
    # computed here once (for all heads) and never written back to HBM.
    hidden = num_heads * head_dim
    rel2 = rel_ref[...].reshape(tq * tk, hidden)
    r2 = jnp.dot(rel2, wr_ref[...], preferred_element_type=jnp.float32)
    r2 = r2 + br_ref[...]

    key_mask = mask_ref[...] > 0.5                  # (1, tk), broadcast over rows
    neg = jnp.float32(-1e15)

    for h in range(num_heads):                      # static unroll over heads
        lo, hi = h * head_dim, (h + 1) * head_dim
        q_h = q_ref[:, lo:hi]                       # (tq, dh)
        k_h = k_ref[:, lo:hi]                       # (tk, dh)
        v_h = v_ref[:, lo:hi]                       # (tk, dh)
        # softmax scale folded into (q+u)/(q+v): an (tq, dh) multiply,
        # not an (tq, tk) one.
        qu = (q_h + u_ref[:, lo:hi]) * scale
        qv = (q_h + vp_ref[:, lo:hi]) * scale

        # A + C term on the MXU.
        ac = jnp.dot(qu, k_h.T, preferred_element_type=jnp.float32)  # (tq, tk)

        r_h = r2[:, lo:hi].reshape(tq, tk, head_dim)                 # (tq, tk, dh)
        if bd_on_mxu:
            # B + D term as a batched (per query row) MXU matmul:
            # (1, dh) x (dh, tk) per row, batch dim = query row.
            bd = jnp.einsum("bqd,bkd->bqk", qv[:, None, :], r_h,
                            preferred_element_type=jnp.float32)[:, 0, :]
        else:
            # Compatibility fallback (VPU broadcast + reduce).
            bd = jnp.sum(qv[:, None, :] * r_h, axis=-1)

        s = jnp.where(key_mask, ac + bd, neg)
        m_prev = m_scr[h]                           # (tq, 1)
        m_new = jnp.maximum(m_prev, jnp.max(s, axis=-1, keepdims=True))
        alpha = jnp.exp(m_prev - m_new)
        p = jnp.exp(s - m_new)
        l_scr[h] = alpha * l_scr[h] + jnp.sum(p, axis=-1, keepdims=True)
        acc_scr[h] = alpha * acc_scr[h] + jnp.dot(
            p, v_h, preferred_element_type=jnp.float32)
        m_scr[h] = m_new

    @pl.when(ki == pl.num_programs(2) - 1)
    def _():
        parts = [acc_scr[h] * pl.reciprocal(l_scr[h], approx=True)
                 for h in range(num_heads)]
        # single lane-dense (tq, H) store
        o_ref[...] = jnp.concatenate(parts, axis=-1).astype(o_ref.dtype)


def lattice_flash_attention(q, k, v, rel, w_r, b_r, u_flat, v_flat, mask, *,
                            num_heads, scale, seq_tile=64):
    """MultiHead_Attention_Lattice_rel: flash-style over key blocks, all heads
    per grid step, w_r projection fused.  q/k/v: (B, L, H); rel: (B, L, L, H)
    (shared, not yet projected by w_r); mask: (B, 1, L) float."""
    B, L, H = q.shape
    dh = H // num_heads
    tq = _seq_tile(L, seq_tile)
    tk = _seq_tile(L, seq_tile)

    def _call(bd_on_mxu):
        kernel = functools.partial(
            _lattice_attn_kernel, num_heads=num_heads, head_dim=dh,
            scale=scale, tq=tq, tk=tk, bd_on_mxu=bd_on_mxu)
        return pl.pallas_call(
            kernel,
            grid=(B, L // tq, L // tk),
            in_specs=[
                pl.BlockSpec((None, tq, H), lambda b, qi, ki: (b, qi, 0)),   # q
                pl.BlockSpec((None, tk, H), lambda b, qi, ki: (b, ki, 0)),   # k
                pl.BlockSpec((None, tk, H), lambda b, qi, ki: (b, ki, 0)),   # v
                pl.BlockSpec((None, tq, tk, H),
                             lambda b, qi, ki: (b, qi, ki, 0)),              # rel
                pl.BlockSpec((H, H), lambda b, qi, ki: (0, 0)),              # w_r
                pl.BlockSpec((1, H), lambda b, qi, ki: (0, 0)),              # b_r
                pl.BlockSpec((1, H), lambda b, qi, ki: (0, 0)),              # u
                pl.BlockSpec((1, H), lambda b, qi, ki: (0, 0)),              # v param
                pl.BlockSpec((None, 1, tk), lambda b, qi, ki: (b, 0, ki)),   # mask
            ],
            out_specs=pl.BlockSpec((None, tq, H), lambda b, qi, ki: (b, qi, 0)),
            out_shape=jax.ShapeDtypeStruct((B, L, H), q.dtype),
            scratch_shapes=[
                pltpu.VMEM((num_heads, tq, 1), jnp.float32),    # running max
                pltpu.VMEM((num_heads, tq, 1), jnp.float32),    # running sum
                pltpu.VMEM((num_heads, tq, dh), jnp.float32),   # output acc
            ],
            compiler_params=pltpu.CompilerParams(
                dimension_semantics=("parallel", "parallel", "arbitrary"),
                vmem_limit_bytes=_VMEM_LIMIT),
        )(q, k, v, rel, w_r, b_r.reshape(1, H), u_flat, v_flat, mask)

    try:
        return _call(True)
    except Exception:
        # Fallback if the batched (M=1 per row) matmul does not lower on this
        # toolchain; identical math on the VPU.
        return _call(False)


# ------------------------------- module glue -------------------------------

def encoder_layer(x, rel, mask, lp, cfg):
    B, L, H = x.shape
    nh = cfg["num_heads"]
    scale = (1.0 / math.sqrt(H // nh)) if cfg["scaled"] else 1.0

    # layer_preprocess('') -> identity
    xf = x.reshape(B * L, H)
    # fused Q/K/V projection: one (H, 3H) matmul
    qkv = fused_linear(xf, lp["w_qkv"], lp["b_qkv"])
    q = qkv[:, :H].reshape(B, L, H)
    k = qkv[:, H:2 * H].reshape(B, L, H)
    v = qkv[:, 2 * H:].reshape(B, L, H)

    attn = lattice_flash_attention(
        q, k, v, rel, lp["w_r"], lp["b_r"], lp["u"], lp["v"], mask,
        num_heads=nh, scale=scale)                                  # (B, L, H)

    # attn_ff=True -> ff_final, fused with layer_postprocess('an')
    out = fused_linear(attn.reshape(B * L, H), lp["w_ff_final"],
                       lp["b_ff_final"],
                       post_ln=(lp["ln_gamma"], lp["ln_beta"]))

    # layer_preprocess('') -> identity, then FFN fused with postprocess('an')
    out = ffn_post(out, lp["w0"], lp["b0"], lp["w1"], lp["b1"],
                   lp["ln_gamma"], lp["ln_beta"])
    return out.reshape(B, L, H)


def transformer_encoder(inp, seq_len, pos_s, pos_e, params, cfg, lex_num=0):
    B, L, H = inp.shape
    # four_pos_fusion_shared=True -> one shared rel_pos_embedding for all layers
    proj = project_pe_tables(params["pe_stack"], params["w_fus"])
    rel = build_rel_pos_embedding(proj, params["b_fus"], pos_s, pos_e,
                                  cfg["max_seq_len"])
    mask = (jnp.arange(L)[None, :] < (seq_len + lex_num)[:, None])
    mask = mask.astype(jnp.float32).reshape(B, 1, L)

    out = inp
    for lp in params["layers"]:
        out = encoder_layer(out, rel, mask, lp, cfg)
    # final layer_preprocess('') -> identity
    return out


# ----------------------------- parameter init ------------------------------

def _init_linear(key, fan_in, fan_out):
    kw, kb = jax.random.split(key)
    bound = 1.0 / math.sqrt(fan_in)
    w = jax.random.uniform(kw, (fan_in, fan_out), jnp.float32, -bound, bound)
    b = jax.random.uniform(kb, (fan_out,), jnp.float32, -bound, bound)
    return w, b


def init_params(key, hidden, num_heads, num_layers, ff_size, max_seq_len):
    dh = hidden // num_heads
    T = 2 * max_seq_len + 1
    keys = jax.random.split(key, 4 + num_layers)

    pe_stack = 0.1 * jax.random.normal(keys[0], (4, T, hidden), jnp.float32)
    # Fusion Linear(4H -> H) stored as the four (H, H) input slices of the
    # (4H, H) weight so the PE tables can be pre-projected once.
    kf = jax.random.split(keys[1], 2)
    bound = 1.0 / math.sqrt(4 * hidden)
    w_fus = jax.random.uniform(kf[0], (4, hidden, hidden), jnp.float32,
                               -bound, bound)
    b_fus = jax.random.uniform(kf[1], (hidden,), jnp.float32, -bound, bound)

    layers = []
    for li in range(num_layers):
        lk = jax.random.split(keys[4 + li], 10)
        w_q, b_q = _init_linear(lk[0], hidden, hidden)
        w_k, b_k = _init_linear(lk[1], hidden, hidden)
        w_v, b_v = _init_linear(lk[2], hidden, hidden)
        w_r, b_r = _init_linear(lk[3], hidden, hidden)
        w_ff_final, b_ff_final = _init_linear(lk[4], hidden, hidden)
        u = 0.02 * jax.random.normal(lk[5], (num_heads, dh), jnp.float32)
        v = 0.02 * jax.random.normal(lk[6], (num_heads, dh), jnp.float32)
        w0, b0 = _init_linear(lk[7], hidden, ff_size)
        w1, b1 = _init_linear(lk[8], ff_size, hidden)
        layers.append({
            "w_qkv": jnp.concatenate([w_q, w_k, w_v], axis=1),   # (H, 3H)
            "b_qkv": jnp.concatenate([b_q, b_k, b_v], axis=0),   # (3H,)
            "w_r": w_r, "b_r": b_r,
            "w_ff_final": w_ff_final, "b_ff_final": b_ff_final,
            "u": u.reshape(1, hidden),       # head-major flattening of (nh, dh)
            "v": v.reshape(1, hidden),
            "w0": w0, "b0": b0, "w1": w1, "b1": b1,
            # layer_postprocess LayerNorm is shared by attn and FFN sublayers
            "ln_gamma": jnp.ones((hidden,), jnp.float32),
            "ln_beta": jnp.zeros((hidden,), jnp.float32),
        })

    return {"pe_stack": pe_stack, "w_fus": w_fus, "b_fus": b_fus,
            "layers": layers}


# ----------------------------------- main -----------------------------------

if __name__ == "__main__":
    B, L, H = 2, 8, 32
    num_heads, num_layers, ff_size, max_seq_len = 4, 2, 64, 8

    cfg = {"hidden_size": H, "num_heads": num_heads,
           "max_seq_len": max_seq_len, "scaled": True,
           "pre_seq": "", "post_seq": "an"}

    key = jax.random.PRNGKey(0)
    k_inp, k_ps, k_pe, k_params = jax.random.split(key, 4)

    inp = jax.random.normal(k_inp, (B, L, H), jnp.float32)
    pos_s = jax.random.randint(k_ps, (B, L), 0, max_seq_len)
    pos_e = jnp.clip(pos_s + jax.random.randint(k_pe, (B, L), 0, 3),
                     0, max_seq_len - 1)
    seq_len = jnp.array([L, L - 2], dtype=jnp.int32)

    params = init_params(k_params, H, num_heads, num_layers, ff_size,
                         max_seq_len)

    out = transformer_encoder(inp, seq_len, pos_s, pos_e, params, cfg,
                              lex_num=0)
    out = jax.block_until_ready(out)
    assert out.shape == (B, L, H)
    assert bool(jnp.all(jnp.isfinite(out)))
    print("KERNEL_OK")
</pallas_src>

<mosaic_0001>
module attributes {stable_mosaic.version = 11 : i64} {
  func.func @_table_proj_kernel(%arg0: i32, %arg1: memref<1x17x32xf32, #tpu.memory_space<vmem>>, %arg2: memref<1x32x32xf32, #tpu.memory_space<vmem>>, %arg3: memref<1x17x32xf32, #tpu.memory_space<vmem>>) attributes {dimension_semantics = [#tpu.dimension_semantics<parallel>], iteration_bounds = array<i64: 4>, scalar_prefetch = 0 : i64, scratch_operands = 0 : i64, tpu.core_type = #tpu.core_type<tc>, window_params = [{transform_indices = @transform_0, window_bounds = array<i64: 1, 17, 32>}, {transform_indices = @transform_1, window_bounds = array<i64: 1, 32, 32>}, {transform_indices = @transform_2, window_bounds = array<i64: 1, 17, 32>}]} {
    %c0 = arith.constant 0 : index
    %c0_0 = arith.constant 0 : index
    %c0_1 = arith.constant 0 : index
    %0 = vector.load %arg1[%c0, %c0_0, %c0_1] : memref<1x17x32xf32, #tpu.memory_space<vmem>>, vector<1x17x32xf32>
    %1 = vector.shape_cast %0 : vector<1x17x32xf32> to vector<17x32xf32>
    %c0_2 = arith.constant 0 : index
    %c0_3 = arith.constant 0 : index
    %c0_4 = arith.constant 0 : index
    %2 = vector.load %arg2[%c0_2, %c0_3, %c0_4] : memref<1x32x32xf32, #tpu.memory_space<vmem>>, vector<1x32x32xf32>
    %3 = vector.shape_cast %2 : vector<1x32x32xf32> to vector<32x32xf32>
    %cst = arith.constant dense<0.000000e+00> : vector<17x32xf32>
    %4 = tpu.matmul %1, %3, %cst {dimension_numbers = #tpu.dot_dimension_numbers<[1], [0], [0], [1], [0, 0, 1, 1], [], []>} : vector<17x32xf32>, vector<32x32xf32>, vector<17x32xf32> -> vector<17x32xf32>
    %c0_5 = arith.constant 0 : index
    %c0_6 = arith.constant 0 : index
    %c0_7 = arith.constant 0 : index
    %5 = vector.load %arg3[%c0_5, %c0_6, %c0_7] : memref<1x17x32xf32, #tpu.memory_space<vmem>>, vector<1x17x32xf32>
    %6 = vector.shape_cast %5 : vector<1x17x32xf32> to vector<17x32xf32>
    %7 = vector.shape_cast %4 : vector<17x32xf32> to vector<1x17x32xf32>
    tpu.vector_store %arg3[%c0_5, %c0_6, %c0_7], %7 {strides = array<i32>} : memref<1x17x32xf32, #tpu.memory_space<vmem>>, vector<1x17x32xf32>,
    return
  }
  func.func @transform_0(%arg0: i32) -> (i32, i32, i32) {
    %c0_i32 = arith.constant 0 : i32
    %c0_i32_0 = arith.constant 0 : i32
    %c0_i32_1 = arith.constant 0 : i32
    return %arg0, %c0_i32, %c0_i32_0 : i32, i32, i32
  }
  func.func @transform_1(%arg0: i32) -> (i32, i32, i32) {
    %c0_i32 = arith.constant 0 : i32
    %c0_i32_0 = arith.constant 0 : i32
    %c0_i32_1 = arith.constant 0 : i32
    return %arg0, %c0_i32, %c0_i32_0 : i32, i32, i32
  }
  func.func @transform_2(%arg0: i32) -> (i32, i32, i32) {
    %c0_i32 = arith.constant 0 : i32
    %c0_i32_0 = arith.constant 0 : i32
    %c0_i32_1 = arith.constant 0 : i32
    return %arg0, %c0_i32, %c0_i32_0 : i32, i32, i32
  }
}

</mosaic_0001>

<llo_original>
// kernel: tpu_custom_call.1
$region0: #{tpu_custom_call.1}
  #allocation0 [shape = 'u32[]', space=smem, size = 0x4, offset = 0x4, fixed_abs, tag = 'smem constant byte address 0x4 - core index']
  #allocation1 [shape = 'u32[144,128]{1,0:T(1,128)}', space=vmem, size = 0x12000, scoped, tag = 'internal scratch']
  %s0 = inlined_call_operand.vmem [shape: f32[4,17,32], index: 0, kind: input, shape index: {}]
  %s1 = inlined_call_operand.vmem [shape: f32[4,32,32], index: 1, kind: input, shape index: {}]
  %s2 = inlined_call_operand.vmem [shape: f32[4,17,32], index: 2, kind: output, shape index: {}]
  %s3 = sld [smem:[#allocation0]]
  $region41: #{tpu_custom_call.1} parent=0
    _
  %s5 = ssub.s32 1, %s3
  %s6 = scalar_select 0, %s5, %s3
  loop: start=0, step=1, limit=6
  $region2: #{tpu_custom_call.1} parent=0 // loop_pre_header
    _
  $region3: #{tpu_custom_call.1} parent=0 // loop_header
    %s8 = sphi 0, %s12
    %p9 = scmp.ge.s32.totalorder %s8, 6
    %s18 = sphi 0, %s20
    %s21 = sphi 0, %s18
    %s22 = sphi 0, %s21
    %s38 = sphi 0, %s22
    %s44 = sphi 0, %s46
    %s47 = sphi 0, %s44
    %s48 = sphi 0, %s47
    %s64 = sphi 0, %s48
    %s70 = sphi 0, %s72
    %s73 = sphi 0, %s70
    %s74 = sphi 0, %s73
    %s90 = sphi 0, %s74
  $region4: #{tpu_custom_call.1} parent=0 // loop_header_branch
    %11 = sbr.rel (%p9) target = $region8
  $region5: #{tpu_custom_call.1} parent=0 // loop_body
    %s13 = ssub.s32 %s8, 1
    %s14 = ssub.s32 %s8, 2
    %s15 = sadd.s32 %s8, 1
    %s16 = ssub.s32 %s8, %s15
    %p17 = scmp.eq.s32.totalorder %s16, 0
    %s19 = sadd.s32 %s18, 1
    %s20 = scalar_select %p17, %s18, %s19
    %p23 = pneg %p17
    %p24 = scmp.eq.s32.totalorder %s8, 3
    %p25 = por %p23, %p24
    %p26 = scmp.ne.s32.totalorder %s18, %s21
    %p27 = scmp.eq.s32.totalorder %s8, 0
    %p28 = por %p26, %p27
    %p29 = scmp.ne.s32.totalorder %s18, %s21
    %p30 = scmp.eq.s32.totalorder %s13, 3
    %p31 = por %p29, %p30
    %p32 = scmp.ne.s32.totalorder %s21, %s22
    %p33 = scmp.eq.s32.totalorder %s13, 0
    %p34 = por %p32, %p33
    %p35 = scmp.ne.s32.totalorder %s21, %s22
    %p36 = scmp.eq.s32.totalorder %s14, 3
    %p37 = por %p35, %p36
    %p39 = scmp.ne.s32.totalorder %s22, %s38
    %p40 = scmp.eq.s32.totalorder %s14, 0
    %p41 = por %p39, %p40
    %s42 = ssub.s32 %s8, %s15
    %p43 = scmp.eq.s32.totalorder %s42, 0
    %s45 = sadd.s32 %s44, 1
    %s46 = scalar_select %p43, %s44, %s45
    %p49 = pneg %p43
    %p50 = scmp.eq.s32.totalorder %s8, 3
    %p51 = por %p49, %p50
    %p52 = scmp.ne.s32.totalorder %s44, %s47
    %p53 = scmp.eq.s32.totalorder %s8, 0
    %p54 = por %p52, %p53
    %p55 = scmp.ne.s32.totalorder %s44, %s47
    %p56 = scmp.eq.s32.totalorder %s13, 3
    %p57 = por %p55, %p56
    %p58 = scmp.ne.s32.totalorder %s47, %s48
    %p59 = scmp.eq.s32.totalorder %s13, 0
    %p60 = por %p58, %p59
    %p61 = scmp.ne.s32.totalorder %s47, %s48
    %p62 = scmp.eq.s32.totalorder %s14, 3
    %p63 = por %p61, %p62
    %p65 = scmp.ne.s32.totalorder %s48, %s64
    %p66 = scmp.eq.s32.totalorder %s14, 0
    %p67 = por %p65, %p66
    %s68 = ssub.s32 %s8, %s15
    %p69 = scmp.eq.s32.totalorder %s68, 0
    %s71 = sadd.s32 %s70, 1
    %s72 = scalar_select %p69, %s70, %s71
    %p75 = pneg %p69
    %p76 = scmp.eq.s32.totalorder %s8, 3
    %p77 = por %p75, %p76
    %p78 = scmp.ne.s32.totalorder %s70, %s73
    %p79 = scmp.eq.s32.totalorder %s8, 0
    %p80 = por %p78, %p79
    %p81 = scmp.ne.s32.totalorder %s70, %s73
    %p82 = scmp.eq.s32.totalorder %s13, 3
    %p83 = por %p81, %p82
    %p84 = scmp.ne.s32.totalorder %s73, %s74
    %p85 = scmp.eq.s32.totalorder %s13, 0
    %p86 = por %p84, %p85
    %p87 = scmp.ne.s32.totalorder %s73, %s74
    %p88 = scmp.eq.s32.totalorder %s14, 3
    %p89 = por %p87, %p88
    %p91 = scmp.ne.s32.totalorder %s74, %s90
    %p92 = scmp.eq.s32.totalorder %s14, 0
    %p93 = por %p91, %p92
    %p94 = scmp.le.s32.totalorder 1, %s8
    %p95 = scmp.lt.s32.totalorder %s8, 5
    %p96 = pnand %p94, %p95
    %p97 = pneg %p96
    // Predicated region
    $region9: #{tpu_custom_call.1} parent=5 // pred_check
      _
    $region10: #{tpu_custom_call.1} parent=5 // pred_check_branch
      %99 = sbr.rel (%p96) target = $region12
    $region11: #{tpu_custom_call.1} parent=5 // pred_region
      %s100 = ssub.s32 %s8, 1
    $region12: #{tpu_custom_call.1} parent=5 // pred_fallthru
      _
    %p101 = scmp.lt.s32.totalorder %s8, 4
    // Predicated region
    $region13: #{tpu_custom_call.1} parent=5 // pred_check
      %p102 = pneg %p101
    $region14: #{tpu_custom_call.1} parent=5 // pred_check_branch
      %104 = sbr.rel (%p102) target = $region16
    $region15: #{tpu_custom_call.1} parent=5 // pred_region
      // Predicated region
      $region17: #{tpu_custom_call.1} parent=15 // pred_check
        %p105 = pneg %p28
      $region18: #{tpu_custom_call.1} parent=15 // pred_check_branch
        %107 = sbr.rel (%p105) target = $region20
      $region19: #{tpu_custom_call.1} parent=15 // pred_region
        %p108 = scmp.lt.s32.totalorder %s8, 3
        %s109 = scalar_select %p108, %s8, 3
        %s110 = smul.addr %s109, 3
        %s111 = smul.addr %s110, 8
        %s112 = scalar_lea.vmem %s0, %s111
      $region20: #{tpu_custom_call.1} parent=15 // pred_fallthru
        _
      // Predicated region
      $region21: #{tpu_custom_call.1} parent=15 // pred_check
        %p113 = pneg %p54
      $region22: #{tpu_custom_call.1} parent=15 // pred_check_branch
        %115 = sbr.rel (%p113) target = $region24
      $region23: #{tpu_custom_call.1} parent=15 // pred_region
        %p116 = scmp.lt.s32.totalorder %s8, 3
        %s117 = scalar_select %p116, %s8, 3
        %s118 = smul.addr %s117, 4
        %s119 = smul.addr %s118, 8
        %s120 = scalar_lea.vmem %s1, %s119
      $region24: #{tpu_custom_call.1} parent=15 // pred_fallthru
        _
    $region16: #{tpu_custom_call.1} parent=5 // pred_fallthru
      _
    %p121 = scmp.le.s32.totalorder 1, %s8
    %p122 = scmp.lt.s32.totalorder %s8, 5
    %p123 = pnand %p121, %p122
    %p124 = pneg %p123
    // Predicated region
    $region25: #{tpu_custom_call.1} parent=5 // pred_check
      _
    $region26: #{tpu_custom_call.1} parent=5 // pred_check_branch
      %126 = sbr.rel (%p123) target = $region28
    $region27: #{tpu_custom_call.1} parent=5 // pred_region
      %s127 = ssub.s32 %s8, 1
      %p128 = scmp.lt.s32.totalorder %s13, 3
      %s129 = scalar_select %p128, %s13, 3
      %s130 = smul.addr %s129, 3
      %s131 = smul.addr %s130, 8
      %s132 = scalar_lea.vmem %s0, %s131
      %p133 = pneg %p34
      %p134 = pneg %p31
      %p135 = scmp.lt.s32.totalorder %s13, 3
      %s136 = scalar_select %p135, %s13, 3
      %s137 = smul.addr %s136, 4
      %s138 = smul.addr %s137, 8
      %s139 = scalar_lea.vmem %s1, %s138
      %p140 = pneg %p60
      %p141 = pneg %p57
      %p142 = pneg %p86
      %p143 = pneg %p83
      %p144 = scmp.lt.s32.totalorder %s13, 3
      %s145 = scalar_select %p144, %s13, 3
      %s146 = smul.addr %s145, 3
      %s147 = smul.addr %s146, 8
      %s148 = scalar_lea.vmem %s2, %s147
      %p149 = scmp.lt.s32.totalorder %s13, 3
      %s150 = scalar_select %p149, %s13, 3
      %s151 = smul.addr %s150, 3
      %s152 = smul.addr %s151, 8
      %s153 = scalar_lea.vmem %s0, %s152
      %p154 = scmp.lt.s32.totalorder %s13, 3
      %s155 = scalar_select %p154, %s13, 3
      %s156 = smul.addr %s155, 4
      %s157 = smul.addr %s156, 8
      %s158 = scalar_lea.vmem %s1, %s157
      %p159 = scmp.lt.s32.totalorder %s13, 3
      %s160 = scalar_select %p159, %s13, 3
      %s161 = smul.addr %s160, 3
      %s162 = smul.addr %s161, 8
      %s163 = scalar_lea.vmem %s2, %s162
      %v164 = vld [vmem:[%s153] sm:$0xff]
      %v165 = vld [vmem:[%s153 + $0x8] sm:$0xff]
      %v166 = vld [vmem:[%s153 + $0x10] sm:$0x1]
      %v167 = vld [vmem:[%s158] sm:$0xff]
      %v168 = vld [vmem:[%s158 + $0x8] sm:$0xff]
      %v169 = vld [vmem:[%s158 + $0x10] sm:$0xff]
      %v170 = vld [vmem:[%s158 + $0x18] sm:$0xff]
      %vm171 = vcmask 261120
      %v173 = vsel %vm171, %v164, 0
      %v176 = vsel %vm171, %v165, 0
      %v179 = vsel %vm171, %v166, 0
      %181 = vmatprep.subr.mxu0 0.0
      %182 = vmatpush1.msra.mxu0 %v167
      %183 = vmatprep.subr.mxu0 0.0
      %184 = vmatpush1.msra.mxu0 %v168
      %185 = vmatprep.subr.mxu0 0.0
      %186 = vmatpush1.msra.mxu0 %v169
      %187 = vmatprep.subr.mxu0 0.0
      %188 = vmatpush1.msra.mxu0 %v170
      %189 = vmatprep.subr.mxu0 0.0
      %190 = vmatpush1.msra.mxu0 0.0
      %191 = vmatprep.subr.mxu0 0.0
      %192 = vmatpush1.msra.mxu0 0.0
      %193 = vmatprep.subr.mxu0 0.0
      %194 = vmatpush1.msra.mxu0 0.0
      %195 = vmatprep.subr.mxu0 0.0
      %196 = vmatpush1.msra.mxu0 0.0
      %197 = vmatprep.subr.mxu0 0.0
      %198 = vmatpush1.msra.mxu0 0.0
      %199 = vmatprep.subr.mxu0 0.0
      %200 = vmatpush1.msra.mxu0 0.0
      %201 = vmatprep.subr.mxu0 0.0
      %202 = vmatpush1.msra.mxu0 0.0
      %203 = vmatprep.subr.mxu0 0.0
      %204 = vmatpush1.msra.mxu0 0.0
      %205 = vmatprep.subr.mxu0 0.0
      %206 = vmatpush1.msra.mxu0 0.0
      %207 = vmatprep.subr.mxu0 0.0
      %208 = vmatpush1.msra.mxu0 0.0
      %209 = vmatprep.subr.mxu0 0.0
      %210 = vmatpush1.msra.mxu0 0.0
      %211 = vmatprep.subr.mxu0 0.0
      %212 = vmatpush1.msra.mxu0 0.0
      %213 = vmatprep.subr.mxu0 0.0
      %214 = vmatpush1.msra.mxu0 0.0
      %215 = vmatprep.subr.mxu0 0.0
      %216 = vmatpush1.msra.mxu0 0.0
      %217 = vmatprep.subr.mxu0 0.0
      %218 = vmatpush1.msra.mxu0 0.0
      %219 = vmatprep.subr.mxu0 0.0
      %220 = vmatpush1.msra.mxu0 0.0
      %221 = vmatprep.subr.mxu0 0.0
      %222 = vmatpush1.msra.mxu0 0.0
      %223 = vmatprep.subr.mxu0 0.0
      %224 = vmatpush1.msra.mxu0 0.0
      %225 = vmatprep.subr.mxu0 0.0
      %226 = vmatpush1.msra.mxu0 0.0
      %227 = vmatprep.subr.mxu0 0.0
      %228 = vmatpush1.msra.mxu0 0.0
      %229 = vmatprep.subr.mxu0 0.0
      %230 = vmatpush1.msra.mxu0 0.0
      %231 = vmatprep.subr.mxu0 0.0
      %232 = vmatpush1.msra.mxu0 0.0
      %233 = vmatprep.subr.mxu0 0.0
      %234 = vmatpush1.msra.mxu0 0.0
      %235 = vmatprep.subr.mxu0 0.0
      %236 = vmatpush1.msra.mxu0 0.0
      %237 = vmatprep.subr.mxu0 0.0
      %238 = vmatpush1.msra.mxu0 0.0
      %239 = vmatprep.subr.mxu0 0.0
      %240 = vmatpush1.msra.mxu0 0.0
      %241 = vmatprep.subr.mxu0 0.0
      %242 = vmatpush1.msra.mxu0 0.0
      %243 = vmatprep.subr.mxu0 0.0
      %244 = vmatpush1.msra.mxu0 0.0
      %245 = vmatprep.mubr.f32.mxu0 0.0
      %246 = vmatmul.mubr.f32.gmra.mrb[0].mxu0 %v173
      %v247 = vpop.f32.mrb[0].mxu0
      %v248 = vadd.f32 0.0, %v247
      %v249 = vpop.f32.mrb[0].mxu0
      %250 = vmatprep.mubr.f32.mxu0 0.0
      %251 = vmatmul.mubr.f32.gmra.mrb[0].mxu0 %v176
      %v252 = vpop.f32.mrb[0].mxu0
      %v253 = vadd.f32 0.0, %v252
      %v254 = vpop.f32.mrb[0].mxu0
      %255 = vmatprep.mubr.f32.mxu0 0.0
      %256 = vmatmul.mubr.f32.gmra.mrb[0].mxu0 %v179
      %v257 = vpop.f32.mrb[0].mxu0
      %v258 = vadd.f32 0.0, %v257
      %v259 = vpop.f32.mrb[0].mxu0
      %260 = vdwg.mxu0
      %261 = vst.msk [vmem:[%s163] sm:$0xff] %vm171, %v248
      %262 = vst.msk [vmem:[%s163 + $0x8] sm:$0xff] %vm171, %v253
      %vm263 = vcmask 253952
      %264 = vst.msk [vmem:[%s163 + $0x10] sm:$0x1] %vm263, %v258
      %p265 = scmp.lt.s32.totalorder %s13, 3
      %s266 = scalar_select %p265, %s13, 3
      %s267 = smul.addr %s266, 3
      %s268 = smul.addr %s267, 8
      %s269 = scalar_lea.vmem %s2, %s268
      // Predicated region
      $region29: #{tpu_custom_call.1} parent=27 // pred_check
        %p270 = pneg %p83
      $region30: #{tpu_custom_call.1} parent=27 // pred_check_branch
        %272 = sbr.rel (%p270) target = $region32
      $region31: #{tpu_custom_call.1} parent=27 // pred_region
        _
      $region32: #{tpu_custom_call.1} parent=27 // pred_fallthru
        _
    $region28: #{tpu_custom_call.1} parent=5 // pred_fallthru
      _
    %p273 = scmp.le.s32.totalorder 2, %s8
    // Predicated region
    $region33: #{tpu_custom_call.1} parent=5 // pred_check
      %p274 = pneg %p273
    $region34: #{tpu_custom_call.1} parent=5 // pred_check_branch
      %276 = sbr.rel (%p274) target = $region36
    $region35: #{tpu_custom_call.1} parent=5 // pred_region
      %s277 = ssub.s32 %s8, 2
      // Predicated region
      $region37: #{tpu_custom_call.1} parent=35 // pred_check
        %p278 = pneg %p89
      $region38: #{tpu_custom_call.1} parent=35 // pred_check_branch
        %280 = sbr.rel (%p278) target = $region40
      $region39: #{tpu_custom_call.1} parent=35 // pred_region
        %p281 = scmp.lt.s32.totalorder %s14, 3
        %s282 = scalar_select %p281, %s14, 3
        %s283 = smul.addr %s282, 3
        %s284 = smul.addr %s283, 8
        %s285 = scalar_lea.vmem %s2, %s284
      $region40: #{tpu_custom_call.1} parent=35 // pred_fallthru
        _
    $region36: #{tpu_custom_call.1} parent=5 // pred_fallthru
      _
  $region6: #{tpu_custom_call.1} parent=0 // loop_footer
    %s12 = sadd.s32 1, %s8
  $region7: #{tpu_custom_call.1} parent=0 // loop_footer_branch
    %7 = sbr.rel target = $region3
  $region8: #{tpu_custom_call.1} parent=0 // loop_exit
    _

</llo_original>
